<compile_context>
chip_gen: v7x
topology: tpu7x:2x2x1
jax: 0.10.0
libtpu: 0.0.40
codegen_flags: <defaults>
</compile_context>

<pallas_src>
import jax
import jax.numpy as jnp
from jax.experimental import pallas as pl
from jax.experimental.pallas import tpu as pltpu


def _round_up(x: int, m: int) -> int:
    return (x + m - 1) // m * m


# ----------------------------------------------------------------------------- kernel
def mlp_kernel(x_ref, w1_ref, b1_ref, w2_ref, b2_ref, w3_ref, b3_ref, o_ref):
    # Three MXU matmuls (bf16 operands, fp32 accumulation) fused with
    # fp32 bias-add + ReLU on the VPU. Everything for one batch tile is
    # VMEM-resident; weights are shared (resident) across grid steps.
    x = x_ref[...]  # bf16 (TB, K1)

    h1 = jnp.dot(x, w1_ref[...], preferred_element_type=jnp.float32) + b1_ref[...]
    h1 = jnp.maximum(h1, 0.0).astype(jnp.bfloat16)

    h2 = jnp.dot(h1, w2_ref[...], preferred_element_type=jnp.float32) + b2_ref[...]
    h2 = jnp.maximum(h2, 0.0).astype(jnp.bfloat16)

    out = jnp.dot(h2, w3_ref[...], preferred_element_type=jnp.float32) + b3_ref[...]
    o_ref[...] = out.astype(o_ref.dtype)


# ----------------------------------------------------------------------------- params
def init_linear(key, fan_in, fan_out):
    """PyTorch-style nn.Linear init: U(-1/sqrt(fan_in), 1/sqrt(fan_in)).

    Weight stored as (fan_in, fan_out) (transpose of PyTorch) so the kernel
    computes y = x @ W + b. Bias kept 2-D (1, fan_out).
    """
    kw, kb = jax.random.split(key)
    bound = 1.0 / jnp.sqrt(jnp.asarray(fan_in, jnp.float32))
    w = jax.random.uniform(kw, (fan_in, fan_out), jnp.float32, -bound, bound)
    b = jax.random.uniform(kb, (1, fan_out), jnp.float32, -bound, bound)
    return w, b


def prepare_params(params):
    """One-time prep: zero-pad every dim to a multiple of 128 (lane-dense) and
    downcast matmul weights to bf16 (halves the dominant HBM transfer).
    Biases stay fp32 for the VPU bias-add."""
    w1, b1, w2, b2, w3, b3 = params
    D_in, H1 = w1.shape
    H2 = w2.shape[1]
    D_out = w3.shape[1]

    K1 = _round_up(D_in, 128)     # 784 -> 896
    H1p = _round_up(H1, 128)      # 128 -> 128
    H2p = _round_up(H2, 128)      # 64  -> 128
    Np = _round_up(D_out, 128)    # 10  -> 128

    bf16, f32 = jnp.bfloat16, jnp.float32
    w1p = jnp.zeros((K1, H1p), bf16).at[:D_in, :H1].set(w1.astype(bf16))
    b1p = jnp.zeros((1, H1p), f32).at[:, :H1].set(b1.astype(f32))
    w2p = jnp.zeros((H1p, H2p), bf16).at[:H1, :H2].set(w2.astype(bf16))
    b2p = jnp.zeros((1, H2p), f32).at[:, :H2].set(b2.astype(f32))
    w3p = jnp.zeros((H2p, Np), bf16).at[:H2, :D_out].set(w3.astype(bf16))
    b3p = jnp.zeros((1, Np), f32).at[:, :D_out].set(b3.astype(f32))

    dims = dict(D_in=D_in, K1=K1, H1p=H1p, H2p=H2p, Np=Np, D_out=D_out)
    return (w1p, b1p, w2p, b2p, w3p, b3p), dims


# ----------------------------------------------------------------------------- wrapper
def classifier_forward(x, padded_params, dims):
    """Fused 3-layer MLP forward. x: (B, D_in) fp32. Returns (B, D_out) fp32."""
    w1p, b1p, w2p, b2p, w3p, b3p = padded_params
    B = x.shape[0]
    D_in, K1 = dims["D_in"], dims["K1"]
    H1p, H2p, Np, D_out = dims["H1p"], dims["H2p"], dims["Np"], dims["D_out"]

    # Batch tile: up to 256 rows per grid step (sublane-aligned), padded with
    # zero rows so the grid divides evenly.
    TB = 256 if B > 256 else _round_up(B, 8)
    Bp = _round_up(B, TB)
    n_steps = Bp // TB

    xp = jnp.zeros((Bp, K1), jnp.bfloat16).at[:B, :D_in].set(x.astype(jnp.bfloat16))

    const = lambda i: (0, 0)  # weights/biases resident across the batch grid
    bytes_accessed = sum(
        a.size * a.dtype.itemsize
        for a in (xp, w1p, b1p, w2p, b2p, w3p, b3p)
    ) + Bp * Np * 4
    cost = pl.CostEstimate(
        flops=2 * Bp * (K1 * H1p + H1p * H2p + H2p * Np),
        transcendentals=0,
        bytes_accessed=bytes_accessed,
    )

    out_padded = pl.pallas_call(
        mlp_kernel,
        out_shape=jax.ShapeDtypeStruct((Bp, Np), jnp.float32),
        grid=(n_steps,),
        in_specs=[
            pl.BlockSpec((TB, K1), lambda i: (i, 0)),
            pl.BlockSpec((K1, H1p), const),
            pl.BlockSpec((1, H1p), const),
            pl.BlockSpec((H1p, H2p), const),
            pl.BlockSpec((1, H2p), const),
            pl.BlockSpec((H2p, Np), const),
            pl.BlockSpec((1, Np), const),
        ],
        out_specs=pl.BlockSpec((TB, Np), lambda i: (i, 0)),
        compiler_params=pltpu.CompilerParams(
            dimension_semantics=("parallel",),
        ),
        cost_estimate=cost,
    )(xp, w1p, b1p, w2p, b2p, w3p, b3p)

    return out_padded[:B, :D_out]


# ----------------------------------------------------------------------------- references
def reference_forward_f32(x, params):
    w1, b1, w2, b2, w3, b3 = params
    h1 = jnp.maximum(x @ w1 + b1, 0.0)
    h2 = jnp.maximum(h1 @ w2 + b2, 0.0)
    return h2 @ w3 + b3


if __name__ == "__main__":
    # MNIST-flavoured MLP shapes (small batch).
    B, D_in, H1, H2, D_out = 8, 784, 128, 64, 10

    key = jax.random.PRNGKey(0)
    kx, k1, k2, k3 = jax.random.split(key, 4)

    x = jax.random.normal(kx, (B, D_in), jnp.float32)
    w1, b1 = init_linear(k1, D_in, H1)
    w2, b2 = init_linear(k2, H1, H2)
    w3, b3 = init_linear(k3, H2, D_out)
    params = (w1, b1, w2, b2, w3, b3)

    padded_params, dims = prepare_params(params)

    out = classifier_forward(x, padded_params, dims)
    out = jax.block_until_ready(out)

    ref = reference_forward_f32(x, params)
    assert out.shape == (B, D_out)
    # bf16 matmul operands with fp32 accumulation -> ~1e-2-level deviation vs fp32.
    assert jnp.allclose(out, ref, atol=5e-2, rtol=5e-2), "mismatch vs JAX reference"

    print("KERNEL_OK")
</pallas_src>

<mosaic_0001>
module attributes {stable_mosaic.version = 11 : i64} {
  func.func @mlp_kernel(%arg0: i32, %arg1: memref<8x896xbf16, #tpu.memory_space<vmem>>, %arg2: memref<896x128xbf16, #tpu.memory_space<vmem>>, %arg3: memref<1x128xf32, #tpu.memory_space<vmem>>, %arg4: memref<128x128xbf16, #tpu.memory_space<vmem>>, %arg5: memref<1x128xf32, #tpu.memory_space<vmem>>, %arg6: memref<128x128xbf16, #tpu.memory_space<vmem>>, %arg7: memref<1x128xf32, #tpu.memory_space<vmem>>, %arg8: memref<8x128xf32, #tpu.memory_space<vmem>>) attributes {dimension_semantics = [#tpu.dimension_semantics<parallel>], iteration_bounds = array<i64: 1>, scalar_prefetch = 0 : i64, scratch_operands = 0 : i64, tpu.core_type = #tpu.core_type<tc>, window_params = [{transform_indices = @transform_0, window_bounds = array<i64: 8, 896>}, {pipeline_mode = #tpu.pipeline_mode<synchronous>, transform_indices = @transform_1, window_bounds = array<i64: 896, 128>}, {pipeline_mode = #tpu.pipeline_mode<synchronous>, transform_indices = @transform_2, window_bounds = array<i64: 1, 128>}, {pipeline_mode = #tpu.pipeline_mode<synchronous>, transform_indices = @transform_3, window_bounds = array<i64: 128, 128>}, {pipeline_mode = #tpu.pipeline_mode<synchronous>, transform_indices = @transform_4, window_bounds = array<i64: 1, 128>}, {pipeline_mode = #tpu.pipeline_mode<synchronous>, transform_indices = @transform_5, window_bounds = array<i64: 128, 128>}, {pipeline_mode = #tpu.pipeline_mode<synchronous>, transform_indices = @transform_6, window_bounds = array<i64: 1, 128>}, {transform_indices = @transform_7, window_bounds = array<i64: 8, 128>}]} {
    %c0 = arith.constant 0 : index
    %c0_0 = arith.constant 0 : index
    %0 = vector.load %arg1[%c0, %c0_0] : memref<8x896xbf16, #tpu.memory_space<vmem>>, vector<8x896xbf16>
    %c0_1 = arith.constant 0 : index
    %c0_2 = arith.constant 0 : index
    %1 = vector.load %arg2[%c0_1, %c0_2] : memref<896x128xbf16, #tpu.memory_space<vmem>>, vector<896x128xbf16>
    %cst = arith.constant dense<0.000000e+00> : vector<8x128xf32>
    %2 = tpu.matmul %0, %1, %cst {dimension_numbers = #tpu.dot_dimension_numbers<[1], [0], [0], [1], [0, 0, 1, 1], [], []>} : vector<8x896xbf16>, vector<896x128xbf16>, vector<8x128xf32> -> vector<8x128xf32>
    %c0_3 = arith.constant 0 : index
    %c0_4 = arith.constant 0 : index
    %3 = vector.load %arg3[%c0_3, %c0_4] : memref<1x128xf32, #tpu.memory_space<vmem>>, vector<1x128xf32>
    %4 = vector.broadcast %3 : vector<1x128xf32> to vector<8x128xf32>
    %5 = arith.addf %2, %4 : vector<8x128xf32>
    %cst_5 = arith.constant 0.000000e+00 : f32
    %6 = vector.broadcast %cst_5 : f32 to vector<8x128xf32>
    %7 = arith.maximumf %5, %6 : vector<8x128xf32>
    %8 = arith.truncf %7 : vector<8x128xf32> to vector<8x128xbf16>
    %c0_6 = arith.constant 0 : index
    %c0_7 = arith.constant 0 : index
    %9 = vector.load %arg4[%c0_6, %c0_7] : memref<128x128xbf16, #tpu.memory_space<vmem>>, vector<128x128xbf16>
    %cst_8 = arith.constant dense<0.000000e+00> : vector<8x128xf32>
    %10 = tpu.matmul %8, %9, %cst_8 {dimension_numbers = #tpu.dot_dimension_numbers<[1], [0], [0], [1], [0, 0, 1, 1], [], []>} : vector<8x128xbf16>, vector<128x128xbf16>, vector<8x128xf32> -> vector<8x128xf32>
    %c0_9 = arith.constant 0 : index
    %c0_10 = arith.constant 0 : index
    %11 = vector.load %arg5[%c0_9, %c0_10] : memref<1x128xf32, #tpu.memory_space<vmem>>, vector<1x128xf32>
    %12 = vector.broadcast %11 : vector<1x128xf32> to vector<8x128xf32>
    %13 = arith.addf %10, %12 : vector<8x128xf32>
    %cst_11 = arith.constant 0.000000e+00 : f32
    %14 = vector.broadcast %cst_11 : f32 to vector<8x128xf32>
    %15 = arith.maximumf %13, %14 : vector<8x128xf32>
    %16 = arith.truncf %15 : vector<8x128xf32> to vector<8x128xbf16>
    %c0_12 = arith.constant 0 : index
    %c0_13 = arith.constant 0 : index
    %17 = vector.load %arg6[%c0_12, %c0_13] : memref<128x128xbf16, #tpu.memory_space<vmem>>, vector<128x128xbf16>
    %cst_14 = arith.constant dense<0.000000e+00> : vector<8x128xf32>
    %18 = tpu.matmul %16, %17, %cst_14 {dimension_numbers = #tpu.dot_dimension_numbers<[1], [0], [0], [1], [0, 0, 1, 1], [], []>} : vector<8x128xbf16>, vector<128x128xbf16>, vector<8x128xf32> -> vector<8x128xf32>
    %c0_15 = arith.constant 0 : index
    %c0_16 = arith.constant 0 : index
    %19 = vector.load %arg7[%c0_15, %c0_16] : memref<1x128xf32, #tpu.memory_space<vmem>>, vector<1x128xf32>
    %20 = vector.broadcast %19 : vector<1x128xf32> to vector<8x128xf32>
    %21 = arith.addf %18, %20 : vector<8x128xf32>
    %c0_17 = arith.constant 0 : index
    %c0_18 = arith.constant 0 : index
    %22 = vector.load %arg8[%c0_17, %c0_18] : memref<8x128xf32, #tpu.memory_space<vmem>>, vector<8x128xf32>
    tpu.vector_store %arg8[%c0_17, %c0_18], %21 {strides = array<i32>} : memref<8x128xf32, #tpu.memory_space<vmem>>, vector<8x128xf32>,
    return
  }
  func.func @transform_0(%arg0: i32) -> (i32, i32) {
    %c0_i32 = arith.constant 0 : i32
    %c0_i32_0 = arith.constant 0 : i32
    return %arg0, %c0_i32 : i32, i32
  }
  func.func @transform_1(%arg0: i32) -> (i32, i32) {
    %c0_i32 = arith.constant 0 : i32
    %c0_i32_0 = arith.constant 0 : i32
    %c0_i32_1 = arith.constant 0 : i32
    return %c0_i32, %c0_i32_0 : i32, i32
  }
  func.func @transform_2(%arg0: i32) -> (i32, i32) {
    %c0_i32 = arith.constant 0 : i32
    %c0_i32_0 = arith.constant 0 : i32
    %c0_i32_1 = arith.constant 0 : i32
    return %c0_i32, %c0_i32_0 : i32, i32
  }
  func.func @transform_3(%arg0: i32) -> (i32, i32) {
    %c0_i32 = arith.constant 0 : i32
    %c0_i32_0 = arith.constant 0 : i32
    %c0_i32_1 = arith.constant 0 : i32
    return %c0_i32, %c0_i32_0 : i32, i32
  }
  func.func @transform_4(%arg0: i32) -> (i32, i32) {
    %c0_i32 = arith.constant 0 : i32
    %c0_i32_0 = arith.constant 0 : i32
    %c0_i32_1 = arith.constant 0 : i32
    return %c0_i32, %c0_i32_0 : i32, i32
  }
  func.func @transform_5(%arg0: i32) -> (i32, i32) {
    %c0_i32 = arith.constant 0 : i32
    %c0_i32_0 = arith.constant 0 : i32
    %c0_i32_1 = arith.constant 0 : i32
    return %c0_i32, %c0_i32_0 : i32, i32
  }
  func.func @transform_6(%arg0: i32) -> (i32, i32) {
    %c0_i32 = arith.constant 0 : i32
    %c0_i32_0 = arith.constant 0 : i32
    %c0_i32_1 = arith.constant 0 : i32
    return %c0_i32, %c0_i32_0 : i32, i32
  }
  func.func @transform_7(%arg0: i32) -> (i32, i32) {
    %c0_i32 = arith.constant 0 : i32
    %c0_i32_0 = arith.constant 0 : i32
    return %arg0, %c0_i32 : i32, i32
  }
}

</mosaic_0001>

<llo_original>
// kernel: tpu_custom_call.1
$region0: #{tpu_custom_call.1}
  #allocation0 [shape = 'u32[]', space=smem, size = 0x4, offset = 0x4, fixed_abs, tag = 'smem constant byte address 0x4 - core index']
  #allocation1 [shape = 'u32[144,128]{1,0:T(1,128)}', space=vmem, size = 0x12000, scoped, tag = 'internal scratch']
  %s0 = inlined_call_operand.hbm [shape: bf16[8,896], index: 0, kind: input, shape index: {}]
  %s1 = inlined_call_operand.hbm [shape: bf16[896,128], index: 1, kind: input, shape index: {}]
  %s2 = inlined_call_operand.vmem [shape: f32[1,128], index: 2, kind: input, shape index: {}]
  %s3 = inlined_call_operand.hbm [shape: bf16[128,128], index: 3, kind: input, shape index: {}]
  %s4 = inlined_call_operand.vmem [shape: f32[1,128], index: 4, kind: input, shape index: {}]
  %s5 = inlined_call_operand.hbm [shape: bf16[128,128], index: 5, kind: input, shape index: {}]
  %s6 = inlined_call_operand.vmem [shape: f32[1,128], index: 6, kind: input, shape index: {}]
  %s7 = inlined_call_operand.hbm [shape: f32[8,128], index: 7, kind: output, shape index: {}]
  %s8 = sld [smem:[#allocation0]]
  $region54: #{tpu_custom_call.1} parent=0
    _
  %s10 = ssub.s32 1, %s8
  %s11 = scalar_select 0, %s10, %s8
  $region1: #{tpu_custom_call.1} parent=0
    #allocation2 [shape = 'u8[14336]{0}', space=vmem, size = 0x3800, scoped, tag = 'input window, operand 0, single buffered']
    #allocation3 [shape = 's32[1]{0}', space=sflag, size = 0x4, scoped, tag = 'scoped memory for tpu_custom_call.1']
    #allocation4 [shape = 's32[1]{0}', space=sflag, size = 0x4, scoped, tag = 'scoped memory for tpu_custom_call.1']
    #allocation5 [shape = 'u8[229376]{0}', space=vmem, size = 0x38000, scoped, tag = 'input window, operand 1, single buffered']
    #allocation6 [shape = 's32[1]{0}', space=sflag, size = 0x4, scoped, tag = 'scoped memory for tpu_custom_call.1']
    #allocation7 [shape = 'u8[32768]{0}', space=vmem, size = 0x8000, scoped, tag = 'input window, operand 3, single buffered']
    #allocation8 [shape = 'u8[32768]{0}', space=vmem, size = 0x8000, scoped, tag = 'input window, operand 5, single buffered']
    #allocation9 [shape = 's32[1]{0}', space=sflag, size = 0x4, scoped, tag = 'scoped memory for tpu_custom_call.1']
    #allocation10 [shape = 'u8[4096]{0}', space=vmem, size = 0x1000, scoped, tag = 'output window, operand 0, single buffered']
    %12 = vsyncpa [#allocation3], 0
    %13 = vsyncpa [#allocation6], 0
    %14 = vsyncpa [#allocation9], 0
    %15 = vsyncpa [#allocation4], 0
    // Predicated region
    $region2: #{tpu_custom_call.1} parent=1 // pred_check
      _
    $region3: #{tpu_custom_call.1} parent=1 // pred_check_branch
      %17 = sbr.rel (0) target = $region5
    $region4: #{tpu_custom_call.1} parent=1 // pred_region
      %s19 = ssub.s32 448, 448
      %20 = vsyncadd [#allocation3], %s19
      %s22 = sshll.u32 [#allocation2], 4
      %s23 = int_to_ptr.vmem [resolvable:$true] %s22
      %25 = dma.hbm_to_vmem [thread:$0]  %s0, 448, %s23, [#allocation3]
    $region5: #{tpu_custom_call.1} parent=1 // pred_fallthru
      _
    // Predicated region
    $region6: #{tpu_custom_call.1} parent=1 // pred_check
      _
    $region7: #{tpu_custom_call.1} parent=1 // pred_check_branch
      %27 = sbr.rel (0) target = $region9
    $region8: #{tpu_custom_call.1} parent=1 // pred_region
      %s29 = ssub.s32 7168, 7168
      %30 = vsyncadd [#allocation6], %s29
      %s31 = sshll.u32 [#allocation5], 4
      %s32 = int_to_ptr.vmem [resolvable:$true] %s31
      %37 = dma.hbm_to_vmem [thread:$0]  %s1, 7168, %s32, [#allocation6], 64, 64, 4
    $region9: #{tpu_custom_call.1} parent=1 // pred_fallthru
      _
    // Predicated region
    $region10: #{tpu_custom_call.1} parent=1 // pred_check
      _
    $region11: #{tpu_custom_call.1} parent=1 // pred_check_branch
      %39 = sbr.rel (0) target = $region13
    $region12: #{tpu_custom_call.1} parent=1 // pred_region
      _
    $region13: #{tpu_custom_call.1} parent=1 // pred_fallthru
      _
    // Predicated region
    $region14: #{tpu_custom_call.1} parent=1 // pred_check
      _
    $region15: #{tpu_custom_call.1} parent=1 // pred_check_branch
      %41 = sbr.rel (0) target = $region17
    $region16: #{tpu_custom_call.1} parent=1 // pred_region
      %s43 = ssub.s32 1024, 1024
      %44 = vsyncadd [#allocation6], %s43
      %s45 = sshll.u32 [#allocation7], 4
      %s46 = int_to_ptr.vmem [resolvable:$true] %s45
      %51 = dma.hbm_to_vmem [thread:$0]  %s3, 1024, %s46, [#allocation6], 64, 64, 4
    $region17: #{tpu_custom_call.1} parent=1 // pred_fallthru
      _
    // Predicated region
    $region18: #{tpu_custom_call.1} parent=1 // pred_check
      _
    $region19: #{tpu_custom_call.1} parent=1 // pred_check_branch
      %53 = sbr.rel (0) target = $region21
    $region20: #{tpu_custom_call.1} parent=1 // pred_region
      _
    $region21: #{tpu_custom_call.1} parent=1 // pred_fallthru
      _
    // Predicated region
    $region22: #{tpu_custom_call.1} parent=1 // pred_check
      _
    $region23: #{tpu_custom_call.1} parent=1 // pred_check_branch
      %55 = sbr.rel (0) target = $region25
    $region24: #{tpu_custom_call.1} parent=1 // pred_region
      %s57 = ssub.s32 1024, 1024
      %58 = vsyncadd [#allocation9], %s57
      %s59 = sshll.u32 [#allocation8], 4
      %s60 = int_to_ptr.vmem [resolvable:$true] %s59
      %65 = dma.hbm_to_vmem [thread:$0]  %s5, 1024, %s60, [#allocation9], 64, 64, 4
    $region25: #{tpu_custom_call.1} parent=1 // pred_fallthru
      _
    // Predicated region
    $region26: #{tpu_custom_call.1} parent=1 // pred_check
      _
    $region27: #{tpu_custom_call.1} parent=1 // pred_check_branch
      %67 = sbr.rel (0) target = $region29
    $region28: #{tpu_custom_call.1} parent=1 // pred_region
      _
    $region29: #{tpu_custom_call.1} parent=1 // pred_fallthru
      _
    // Predicated region
    $region30: #{tpu_custom_call.1} parent=1 // pred_check
      _
    $region31: #{tpu_custom_call.1} parent=1 // pred_check_branch
      %69 = sbr.rel (0) target = $region33
    $region32: #{tpu_custom_call.1} parent=1 // pred_region
      %70 = dma.done [#allocation3], 448
    $region33: #{tpu_custom_call.1} parent=1 // pred_fallthru
      _
    // Predicated region
    $region34: #{tpu_custom_call.1} parent=1 // pred_check
      _
    $region35: #{tpu_custom_call.1} parent=1 // pred_check_branch
      %72 = sbr.rel (0) target = $region37
    $region36: #{tpu_custom_call.1} parent=1 // pred_region
      %73 = dma.done [#allocation6], 7168
    $region37: #{tpu_custom_call.1} parent=1 // pred_fallthru
      _
    // Predicated region
    $region38: #{tpu_custom_call.1} parent=1 // pred_check
      _
    $region39: #{tpu_custom_call.1} parent=1 // pred_check_branch
      %75 = sbr.rel (0) target = $region41
    $region40: #{tpu_custom_call.1} parent=1 // pred_region
      %76 = dma.done [#allocation6], 1024
    $region41: #{tpu_custom_call.1} parent=1 // pred_fallthru
      _
    // Predicated region
    $region42: #{tpu_custom_call.1} parent=1 // pred_check
      _
    $region43: #{tpu_custom_call.1} parent=1 // pred_check_branch
      %78 = sbr.rel (0) target = $region45
    $region44: #{tpu_custom_call.1} parent=1 // pred_region
      %79 = dma.done [#allocation9], 1024
    $region45: #{tpu_custom_call.1} parent=1 // pred_fallthru
      _
    %v81 = vld [vmem:[#allocation2] sm:$0xff]
    %v82 = vld [vmem:[#allocation2 + $0x8] sm:$0xff]
    %v83 = vld [vmem:[#allocation2 + $0x10] sm:$0xff]
    %v84 = vld [vmem:[#allocation2 + $0x18] sm:$0xf]
    %v85 = vld [vmem:[#allocation5] sm:$0xf]
    %v86 = vld [vmem:[#allocation5 + $0x4] sm:$0xf]
    %v87 = vld [vmem:[#allocation5 + $0x8] sm:$0xf]
    %v88 = vld [vmem:[#allocation5 + $0xc] sm:$0xf]
    %v89 = vld [vmem:[#allocation5 + $0x10] sm:$0xf]
    %v90 = vld [vmem:[#allocation5 + $0x14] sm:$0xf]
    %v91 = vld [vmem:[#allocation5 + $0x18] sm:$0xf]
    %v92 = vld [vmem:[#allocation5 + $0x1c] sm:$0xf]
    %v93 = vld [vmem:[#allocation5 + $0x20] sm:$0xf]
    %v94 = vld [vmem:[#allocation5 + $0x24] sm:$0xf]
    %v95 = vld [vmem:[#allocation5 + $0x28] sm:$0xf]
    %v96 = vld [vmem:[#allocation5 + $0x2c] sm:$0xf]
    %v97 = vld [vmem:[#allocation5 + $0x30] sm:$0xf]
    %v98 = vld [vmem:[#allocation5 + $0x34] sm:$0xf]
    %v99 = vld [vmem:[#allocation5 + $0x38] sm:$0xf]
    %v100 = vld [vmem:[#allocation5 + $0x3c] sm:$0xf]
    %v101 = vld [vmem:[#allocation5 + $0x40] sm:$0xf]
    %v102 = vld [vmem:[#allocation5 + $0x44] sm:$0xf]
    %v103 = vld [vmem:[#allocation5 + $0x48] sm:$0xf]
    %v104 = vld [vmem:[#allocation5 + $0x4c] sm:$0xf]
    %v105 = vld [vmem:[#allocation5 + $0x50] sm:$0xf]
    %v106 = vld [vmem:[#allocation5 + $0x54] sm:$0xf]
    %v107 = vld [vmem:[#allocation5 + $0x58] sm:$0xf]
    %v108 = vld [vmem:[#allocation5 + $0x5c] sm:$0xf]
    %v109 = vld [vmem:[#allocation5 + $0x60] sm:$0xf]
    %v110 = vld [vmem:[#allocation5 + $0x64] sm:$0xf]
    %v111 = vld [vmem:[#allocation5 + $0x68] sm:$0xf]
    %v112 = vld [vmem:[#allocation5 + $0x6c] sm:$0xf]
    %v113 = vld [vmem:[#allocation5 + $0x70] sm:$0xf]
    %v114 = vld [vmem:[#allocation5 + $0x74] sm:$0xf]
    %v115 = vld [vmem:[#allocation5 + $0x78] sm:$0xf]
    %v116 = vld [vmem:[#allocation5 + $0x7c] sm:$0xf]
    %v117 = vld [vmem:[#allocation5 + $0x80] sm:$0xf]
    %v118 = vld [vmem:[#allocation5 + $0x84] sm:$0xf]
    %v119 = vld [vmem:[#allocation5 + $0x88] sm:$0xf]
    %v120 = vld [vmem:[#allocation5 + $0x8c] sm:$0xf]
    %v121 = vld [vmem:[#allocation5 + $0x90] sm:$0xf]
    %v122 = vld [vmem:[#allocation5 + $0x94] sm:$0xf]
    %v123 = vld [vmem:[#allocation5 + $0x98] sm:$0xf]
    %v124 = vld [vmem:[#allocation5 + $0x9c] sm:$0xf]
    %v125 = vld [vmem:[#allocation5 + $0xa0] sm:$0xf]
    %v126 = vld [vmem:[#allocation5 + $0xa4] sm:$0xf]
    %v127 = vld [vmem:[#allocation5 + $0xa8] sm:$0xf]
    %v128 = vld [vmem:[#allocation5 + $0xac] sm:$0xf]
    %v129 = vld [vmem:[#allocation5 + $0xb0] sm:$0xf]
    %v130 = vld [vmem:[#allocation5 + $0xb4] sm:$0xf]
    %v131 = vld [vmem:[#allocation5 + $0xb8] sm:$0xf]
    %v132 = vld [vmem:[#allocation5 + $0xbc] sm:$0xf]
    %v133 = vld [vmem:[#allocation5 + $0xc0] sm:$0xf]
    %v134 = vld [vmem:[#allocation5 + $0xc4] sm:$0xf]
    %v135 = vld [vmem:[#allocation5 + $0xc8] sm:$0xf]
    %v136 = vld [vmem:[#allocation5 + $0xcc] sm:$0xf]
    %v137 = vld [vmem:[#allocation5 + $0xd0] sm:$0xf]
    %v138 = vld [vmem:[#allocation5 + $0xd4] sm:$0xf]
    %v139 = vld [vmem:[#allocation5 + $0xd8] sm:$0xf]
    %v140 = vld [vmem:[#allocation5 + $0xdc] sm:$0xf]
    %v141 = vld [vmem:[#allocation5 + $0xe0] sm:$0xf]
    %v142 = vld [vmem:[#allocation5 + $0xe4] sm:$0xf]
    %v143 = vld [vmem:[#allocation5 + $0xe8] sm:$0xf]
    %v144 = vld [vmem:[#allocation5 + $0xec] sm:$0xf]
    %v145 = vld [vmem:[#allocation5 + $0xf0] sm:$0xf]
    %v146 = vld [vmem:[#allocation5 + $0xf4] sm:$0xf]
    %v147 = vld [vmem:[#allocation5 + $0xf8] sm:$0xf]
    %v148 = vld [vmem:[#allocation5 + $0xfc] sm:$0xf]
    %v149 = vld [vmem:[#allocation5 + $0x100] sm:$0xf]
    %v150 = vld [vmem:[#allocation5 + $0x104] sm:$0xf]
    %v151 = vld [vmem:[#allocation5 + $0x108] sm:$0xf]
    %v152 = vld [vmem:[#allocation5 + $0x10c] sm:$0xf]
    %v153 = vld [vmem:[#allocation5 + $0x110] sm:$0xf]
    %v154 = vld [vmem:[#allocation5 + $0x114] sm:$0xf]
    %v155 = vld [vmem:[#allocation5 + $0x118] sm:$0xf]
    %v156 = vld [vmem:[#allocation5 + $0x11c] sm:$0xf]
    %v157 = vld [vmem:[#allocation5 + $0x120] sm:$0xf]
    %v158 = vld [vmem:[#allocation5 + $0x124] sm:$0xf]
    %v159 = vld [vmem:[#allocation5 + $0x128] sm:$0xf]
    %v160 = vld [vmem:[#allocation5 + $0x12c] sm:$0xf]
    %v161 = vld [vmem:[#allocation5 + $0x130] sm:$0xf]
    %v162 = vld [vmem:[#allocation5 + $0x134] sm:$0xf]
    %v163 = vld [vmem:[#allocation5 + $0x138] sm:$0xf]
    %v164 = vld [vmem:[#allocation5 + $0x13c] sm:$0xf]
    %v165 = vld [vmem:[#allocation5 + $0x140] sm:$0xf]
    %v166 = vld [vmem:[#allocation5 + $0x144] sm:$0xf]
    %v167 = vld [vmem:[#allocation5 + $0x148] sm:$0xf]
    %v168 = vld [vmem:[#allocation5 + $0x14c] sm:$0xf]
    %v169 = vld [vmem:[#allocation5 + $0x150] sm:$0xf]
    %v170 = vld [vmem:[#allocation5 + $0x154] sm:$0xf]
    %v171 = vld [vmem:[#allocation5 + $0x158] sm:$0xf]
    %v172 = vld [vmem:[#allocation5 + $0x15c] sm:$0xf]
    %v173 = vld [vmem:[#allocation5 + $0x160] sm:$0xf]
    %v174 = vld [vmem:[#allocation5 + $0x164] sm:$0xf]
    %v175 = vld [vmem:[#allocation5 + $0x168] sm:$0xf]
    %v176 = vld [vmem:[#allocation5 + $0x16c] sm:$0xf]
    %v177 = vld [vmem:[#allocation5 + $0x170] sm:$0xf]
    %v178 = vld [vmem:[#allocation5 + $0x174] sm:$0xf]
    %v179 = vld [vmem:[#allocation5 + $0x178] sm:$0xf]
    %v180 = vld [vmem:[#allocation5 + $0x17c] sm:$0xf]
    %v181 = vld [vmem:[#allocation5 + $0x180] sm:$0xf]
    %v182 = vld [vmem:[#allocation5 + $0x184] sm:$0xf]
    %v183 = vld [vmem:[#allocation5 + $0x188] sm:$0xf]
    %v184 = vld [vmem:[#allocation5 + $0x18c] sm:$0xf]
    %v185 = vld [vmem:[#allocation5 + $0x190] sm:$0xf]
    %v186 = vld [vmem:[#allocation5 + $0x194] sm:$0xf]
    %v187 = vld [vmem:[#allocation5 + $0x198] sm:$0xf]
    %v188 = vld [vmem:[#allocation5 + $0x19c] sm:$0xf]
    %v189 = vld [vmem:[#allocation5 + $0x1a0] sm:$0xf]
    %v190 = vld [vmem:[#allocation5 + $0x1a4] sm:$0xf]
    %v191 = vld [vmem:[#allocation5 + $0x1a8] sm:$0xf]
    %v192 = vld [vmem:[#allocation5 + $0x1ac] sm:$0xf]
    %v193 = vld [vmem:[#allocation5 + $0x1b0] sm:$0xf]
    %v194 = vld [vmem:[#allocation5 + $0x1b4] sm:$0xf]
    %v195 = vld [vmem:[#allocation5 + $0x1b8] sm:$0xf]
    %v196 = vld [vmem:[#allocation5 + $0x1bc] sm:$0xf]
    %v197 = vld [vmem:[%s2] sm:$0x1]
    %v199 = vlaneseq
    %v200 = vshrl.u32 %v199, 7
    %v201 = vsub.s32 0, %v200
    %v202 = vrot.slane %v197, %v201
    %v208 = vunpack.c.l.b16 %v81
    %v209 = vunpack.c.h.b16 %v81
    %v210 = vunpack.c.l.b16 %v82
    %v211 = vunpack.c.h.b16 %v82
    %v212 = vunpack.c.l.b16 %v83
    %v213 = vunpack.c.h.b16 %v83
    %v214 = vunpack.c.l.b16 %v84
    %v215 = vpack.c.b16 %v208, %v208
    %v216 = vpack.c.b16 %v209, %v209
    %v217 = vpack.c.b16 %v210, %v210
    %v218 = vpack.c.b16 %v211, %v211
    %v219 = vpack.c.b16 %v212, %v212
    %v220 = vpack.c.b16 %v213, %v213
    %v221 = vpack.c.b16 %v214, %v214
    %v341 = vunpack.c.l.b16 %v85
    %v342 = vunpack.c.l.b16 %v86
    %v343 = vunpack.c.l.b16 %v87
    %v344 = vunpack.c.l.b16 %v88
    %v345 = vunpack.c.l.b16 %v89
    %v346 = vunpack.c.l.b16 %v90
    %v347 = vunpack.c.l.b16 %v91
    %v348 = vunpack.c.l.b16 %v92
    %v349 = vunpack.c.l.b16 %v93
    %v350 = vunpack.c.l.b16 %v94
    %v351 = vunpack.c.l.b16 %v95
    %v352 = vunpack.c.l.b16 %v96
    %v353 = vunpack.c.l.b16 %v97
    %v354 = vunpack.c.l.b16 %v98
    %v355 = vunpack.c.l.b16 %v99
    %v356 = vunpack.c.l.b16 %v100
    %v357 = vunpack.c.l.b16 %v101
    %v358 = vunpack.c.l.b16 %v102
    %v359 = vunpack.c.l.b16 %v103
    %v360 = vunpack.c.l.b16 %v104
    %v361 = vunpack.c.l.b16 %v105
    %v362 = vunpack.c.l.b16 %v106
    %v363 = vunpack.c.l.b16 %v107
    %v364 = vunpack.c.l.b16 %v108
    %v365 = vunpack.c.l.b16 %v109
    %v366 = vunpack.c.l.b16 %v110
    %v367 = vunpack.c.l.b16 %v111
    %v368 = vunpack.c.l.b16 %v112
    %v369 = vunpack.c.l.b16 %v113
    %v370 = vunpack.c.l.b16 %v114
    %v371 = vunpack.c.l.b16 %v115
    %v372 = vunpack.c.l.b16 %v116
    %v373 = vunpack.c.l.b16 %v117
    %v374 = vunpack.c.l.b16 %v118
    %v375 = vunpack.c.l.b16 %v119
    %v376 = vunpack.c.l.b16 %v120
    %v377 = vunpack.c.l.b16 %v121
    %v378 = vunpack.c.l.b16 %v122
    %v379 = vunpack.c.l.b16 %v123
    %v380 = vunpack.c.l.b16 %v124
    %v381 = vunpack.c.l.b16 %v125
    %v382 = vunpack.c.l.b16 %v126
    %v383 = vunpack.c.l.b16 %v127
    %v384 = vunpack.c.l.b16 %v128
    %v385 = vunpack.c.l.b16 %v129
    %v386 = vunpack.c.l.b16 %v130
    %v387 = vunpack.c.l.b16 %v131
    %v388 = vunpack.c.l.b16 %v132
    %v389 = vunpack.c.l.b16 %v133
    %v390 = vunpack.c.l.b16 %v134
    %v391 = vunpack.c.l.b16 %v135
    %v392 = vunpack.c.l.b16 %v136
    %v393 = vunpack.c.l.b16 %v137
    %v394 = vunpack.c.l.b16 %v138
    %v395 = vunpack.c.l.b16 %v139
    %v396 = vunpack.c.l.b16 %v140
    %v397 = vunpack.c.l.b16 %v141
    %v398 = vunpack.c.l.b16 %v142
    %v399 = vunpack.c.l.b16 %v143
    %v400 = vunpack.c.l.b16 %v144
    %v401 = vunpack.c.l.b16 %v145
    %v402 = vunpack.c.l.b16 %v146
    %v403 = vunpack.c.l.b16 %v147
    %v404 = vunpack.c.l.b16 %v148
    %v405 = vunpack.c.l.b16 %v149
    %v406 = vunpack.c.l.b16 %v150
    %v407 = vunpack.c.l.b16 %v151
    %v408 = vunpack.c.l.b16 %v152
    %v409 = vunpack.c.l.b16 %v153
    %v410 = vunpack.c.l.b16 %v154
    %v411 = vunpack.c.l.b16 %v155
    %v412 = vunpack.c.l.b16 %v156
    %v413 = vunpack.c.l.b16 %v157
    %v414 = vunpack.c.l.b16 %v158
    %v415 = vunpack.c.l.b16 %v159
    %v416 = vunpack.c.l.b16 %v160
    %v417 = vunpack.c.l.b16 %v161
    %v418 = vunpack.c.l.b16 %v162
    %v419 = vunpack.c.l.b16 %v163
    %v420 = vunpack.c.l.b16 %v164
    %v421 = vunpack.c.l.b16 %v165
    %v422 = vunpack.c.l.b16 %v166
    %v423 = vunpack.c.l.b16 %v167
    %v424 = vunpack.c.l.b16 %v168
    %v425 = vunpack.c.l.b16 %v169
    %v426 = vunpack.c.l.b16 %v170
    %v427 = vunpack.c.l.b16 %v171
    %v428 = vunpack.c.l.b16 %v172
    %v429 = vunpack.c.l.b16 %v173
    %v430 = vunpack.c.l.b16 %v174
    %v431 = vunpack.c.l.b16 %v175
    %v432 = vunpack.c.l.b16 %v176
    %v433 = vunpack.c.l.b16 %v177
    %v434 = vunpack.c.l.b16 %v178
    %v435 = vunpack.c.l.b16 %v179
    %v436 = vunpack.c.l.b16 %v180
    %v437 = vunpack.c.l.b16 %v181
    %v438 = vunpack.c.l.b16 %v182
    %v439 = vunpack.c.l.b16 %v183
    %v440 = vunpack.c.l.b16 %v184
    %v441 = vunpack.c.l.b16 %v185
    %v442 = vunpack.c.l.b16 %v186
    %v443 = vunpack.c.l.b16 %v187
    %v444 = vunpack.c.l.b16 %v188
    %v445 = vunpack.c.l.b16 %v189
    %v446 = vunpack.c.l.b16 %v190
    %v447 = vunpack.c.l.b16 %v191
    %v448 = vunpack.c.l.b16 %v192
    %v449 = vunpack.c.l.b16 %v193
    %v450 = vunpack.c.l.b16 %v194
    %v451 = vunpack.c.l.b16 %v195
    %v452 = vunpack.c.l.b16 %v196
    %v453 = vpack.c.b16 %v342, %v341
    %v454 = vpack.c.b16 %v344, %v343
    %v455 = vpack.c.b16 %v346, %v345
    %v456 = vpack.c.b16 %v348, %v347
    %v457 = vpack.c.b16 %v350, %v349
    %v458 = vpack.c.b16 %v352, %v351
    %v459 = vpack.c.b16 %v354, %v353
    %v460 = vpack.c.b16 %v356, %v355
    %v461 = vpack.c.b16 %v358, %v357
    %v462 = vpack.c.b16 %v360, %v359
    %v463 = vpack.c.b16 %v362, %v361
    %v464 = vpack.c.b16 %v364, %v363
    %v465 = vpack.c.b16 %v366, %v365
    %v466 = vpack.c.b16 %v368, %v367
    %v467 = vpack.c.b16 %v370, %v369
    %v468 = vpack.c.b16 %v372, %v371
    %v469 = vpack.c.b16 %v374, %v373
    %v470 = vpack.c.b16 %v376, %v375
    %v471 = vpack.c.b16 %v378, %v377
    %v472 = vpack.c.b16 %v380, %v379
    %v473 = vpack.c.b16 %v382, %v381
    %v474 = vpack.c.b16 %v384, %v383
    %v475 = vpack.c.b16 %v386, %v385
    %v476 = vpack.c.b16 %v388, %v387
    %v477 = vpack.c.b16 %v390, %v389
    %v478 = vpack.c.b16 %v392, %v391
    %v479 = vpack.c.b16 %v394, %v393
    %v480 = vpack.c.b16 %v396, %v395
    %v481 = vpack.c.b16 %v398, %v397
    %v482 = vpack.c.b16 %v400, %v399
    %v483 = vpack.c.b16 %v402, %v401
    %v484 = vpack.c.b16 %v404, %v403
    %v485 = vpack.c.b16 %v406, %v405
    %v486 = vpack.c.b16 %v408, %v407
    %v487 = vpack.c.b16 %v410, %v409
    %v488 = vpack.c.b16 %v412, %v411
    %v489 = vpack.c.b16 %v414, %v413
    %v490 = vpack.c.b16 %v416, %v415
    %v491 = vpack.c.b16 %v418, %v417
    %v492 = vpack.c.b16 %v420, %v419
    %v493 = vpack.c.b16 %v422, %v421
    %v494 = vpack.c.b16 %v424, %v423
    %v495 = vpack.c.b16 %v426, %v425
    %v496 = vpack.c.b16 %v428, %v427
    %v497 = vpack.c.b16 %v430, %v429
    %v498 = vpack.c.b16 %v432, %v431
    %v499 = vpack.c.b16 %v434, %v433
    %v500 = vpack.c.b16 %v436, %v435
    %v501 = vpack.c.b16 %v438, %v437
    %v502 = vpack.c.b16 %v440, %v439
    %v503 = vpack.c.b16 %v442, %v441
    %v504 = vpack.c.b16 %v444, %v443
    %v505 = vpack.c.b16 %v446, %v445
    %v506 = vpack.c.b16 %v448, %v447
    %v507 = vpack.c.b16 %v450, %v449
    %v508 = vpack.c.b16 %v452, %v451
    %565 = vmatprep.subr.bf16.mxu0 0
    %566 = vmatpush1.bf16.msra.mxu0 %v453
    %567 = vmatprep.subr.bf16.mxu0 0
    %568 = vmatpush1.bf16.msra.mxu0 %v454
    %569 = vmatprep.subr.bf16.mxu0 0
    %570 = vmatpush1.bf16.msra.mxu0 %v455
    %571 = vmatprep.subr.bf16.mxu0 0
    %572 = vmatpush1.bf16.msra.mxu0 %v456
    %573 = vmatprep.subr.bf16.mxu0 0
    %574 = vmatpush1.bf16.msra.mxu0 %v457
    %575 = vmatprep.subr.bf16.mxu0 0
    %576 = vmatpush1.bf16.msra.mxu0 %v458
    %577 = vmatprep.subr.bf16.mxu0 0
    %578 = vmatpush1.bf16.msra.mxu0 %v459
    %579 = vmatprep.subr.bf16.mxu0 0
    %580 = vmatpush1.bf16.msra.mxu0 %v460
    %581 = vmatprep.subr.bf16.mxu0 0
    %582 = vmatpush1.bf16.msra.mxu0 %v461
    %583 = vmatprep.subr.bf16.mxu0 0
    %584 = vmatpush1.bf16.msra.mxu0 %v462
    %585 = vmatprep.subr.bf16.mxu0 0
    %586 = vmatpush1.bf16.msra.mxu0 %v463
    %587 = vmatprep.subr.bf16.mxu0 0
    %588 = vmatpush1.bf16.msra.mxu0 %v464
    %589 = vmatprep.subr.bf16.mxu0 0
    %590 = vmatpush1.bf16.msra.mxu0 %v465
    %591 = vmatprep.subr.bf16.mxu0 0
    %592 = vmatpush1.bf16.msra.mxu0 %v466
    %593 = vmatprep.subr.bf16.mxu0 0
    %594 = vmatpush1.bf16.msra.mxu0 %v467
    %595 = vmatprep.subr.bf16.mxu0 0
    %596 = vmatpush1.bf16.msra.mxu0 %v468
    %597 = vmatprep.mubr.bf16.mxu0 %v216
    %598 = vmatmul.mubr.bf16.gmra.mrb[0].mxu0 %v215
    %v599 = vpop.f32.mrb[0].mxu0
    %v600 = vadd.f32 %v202, %v599
    %v601 = vpop.f32.mrb[0].mxu0
    %v602 = vpop.f32.mrb[0].mxu0
    %v603 = vpop.f32.mrb[0].mxu0
    %604 = vdwg.mxu0
    %605 = vmatprep.subr.bf16.mxu0 0
    %606 = vmatpush1.bf16.msra.mxu0 %v469
    %607 = vmatprep.subr.bf16.mxu0 0
    %608 = vmatpush1.bf16.msra.mxu0 %v470
    %609 = vmatprep.subr.bf16.mxu0 0
    %610 = vmatpush1.bf16.msra.mxu0 %v471
    %611 = vmatprep.subr.bf16.mxu0 0
    %612 = vmatpush1.bf16.msra.mxu0 %v472
    %613 = vmatprep.subr.bf16.mxu0 0
    %614 = vmatpush1.bf16.msra.mxu0 %v473
    %615 = vmatprep.subr.bf16.mxu0 0
    %616 = vmatpush1.bf16.msra.mxu0 %v474
    %617 = vmatprep.subr.bf16.mxu0 0
    %618 = vmatpush1.bf16.msra.mxu0 %v475
    %619 = vmatprep.subr.bf16.mxu0 0
    %620 = vmatpush1.bf16.msra.mxu0 %v476
    %621 = vmatprep.subr.bf16.mxu0 0
    %622 = vmatpush1.bf16.msra.mxu0 %v477
    %623 = vmatprep.subr.bf16.mxu0 0
    %624 = vmatpush1.bf16.msra.mxu0 %v478
    %625 = vmatprep.subr.bf16.mxu0 0
    %626 = vmatpush1.bf16.msra.mxu0 %v479
    %627 = vmatprep.subr.bf16.mxu0 0
    %628 = vmatpush1.bf16.msra.mxu0 %v480
    %629 = vmatprep.subr.bf16.mxu0 0
    %630 = vmatpush1.bf16.msra.mxu0 %v481
    %631 = vmatprep.subr.bf16.mxu0 0
    %632 = vmatpush1.bf16.msra.mxu0 %v482
    %633 = vmatprep.subr.bf16.mxu0 0
    %634 = vmatpush1.bf16.msra.mxu0 %v483
    %635 = vmatprep.subr.bf16.mxu0 0
    %636 = vmatpush1.bf16.msra.mxu0 %v484
    %637 = vmatprep.mubr.bf16.mxu0 %v218
    %638 = vmatmul.mubr.bf16.gmra.mrb[0].mxu0 %v217
    %v639 = vpop.f32.mrb[0].mxu0
    %v640 = vadd.f32 %v600, %v639
    %v641 = vpop.f32.mrb[0].mxu0
    %v642 = vpop.f32.mrb[0].mxu0
    %v643 = vpop.f32.mrb[0].mxu0
    %644 = vdwg.mxu0
    %645 = vmatprep.subr.bf16.mxu0 0
    %646 = vmatpush1.bf16.msra.mxu0 %v485
    %647 = vmatprep.subr.bf16.mxu0 0
    %648 = vmatpush1.bf16.msra.mxu0 %v486
    %649 = vmatprep.subr.bf16.mxu0 0
    %650 = vmatpush1.bf16.msra.mxu0 %v487
    %651 = vmatprep.subr.bf16.mxu0 0
    %652 = vmatpush1.bf16.msra.mxu0 %v488
    %653 = vmatprep.subr.bf16.mxu0 0
    %654 = vmatpush1.bf16.msra.mxu0 %v489
    %655 = vmatprep.subr.bf16.mxu0 0
    %656 = vmatpush1.bf16.msra.mxu0 %v490
    %657 = vmatprep.subr.bf16.mxu0 0
    %658 = vmatpush1.bf16.msra.mxu0 %v491
    %659 = vmatprep.subr.bf16.mxu0 0
    %660 = vmatpush1.bf16.msra.mxu0 %v492
    %661 = vmatprep.subr.bf16.mxu0 0
    %662 = vmatpush1.bf16.msra.mxu0 %v493
    %663 = vmatprep.subr.bf16.mxu0 0
    %664 = vmatpush1.bf16.msra.mxu0 %v494
    %665 = vmatprep.subr.bf16.mxu0 0
    %666 = vmatpush1.bf16.msra.mxu0 %v495
    %667 = vmatprep.subr.bf16.mxu0 0
    %668 = vmatpush1.bf16.msra.mxu0 %v496
    %669 = vmatprep.subr.bf16.mxu0 0
    %670 = vmatpush1.bf16.msra.mxu0 %v497
    %671 = vmatprep.subr.bf16.mxu0 0
    %672 = vmatpush1.bf16.msra.mxu0 %v498
    %673 = vmatprep.subr.bf16.mxu0 0
    %674 = vmatpush1.bf16.msra.mxu0 %v499
    %675 = vmatprep.subr.bf16.mxu0 0
    %676 = vmatpush1.bf16.msra.mxu0 %v500
    %677 = vmatprep.mubr.bf16.mxu0 %v220
    %678 = vmatmul.mubr.bf16.gmra.mrb[0].mxu0 %v219
    %v679 = vpop.f32.mrb[0].mxu0
    %v680 = vadd.f32 %v640, %v679
    %v681 = vpop.f32.mrb[0].mxu0
    %v682 = vpop.f32.mrb[0].mxu0
    %v683 = vpop.f32.mrb[0].mxu0
    %684 = vdwg.mxu0
    %685 = vmatprep.subr.bf16.mxu0 0
    %686 = vmatpush1.bf16.msra.mxu0 %v501
    %687 = vmatprep.subr.bf16.mxu0 0
    %688 = vmatpush1.bf16.msra.mxu0 %v502
    %689 = vmatprep.subr.bf16.mxu0 0
    %690 = vmatpush1.bf16.msra.mxu0 %v503
    %691 = vmatprep.subr.bf16.mxu0 0
    %692 = vmatpush1.bf16.msra.mxu0 %v504
    %693 = vmatprep.subr.bf16.mxu0 0
    %694 = vmatpush1.bf16.msra.mxu0 %v505
    %695 = vmatprep.subr.bf16.mxu0 0
    %696 = vmatpush1.bf16.msra.mxu0 %v506
    %697 = vmatprep.subr.bf16.mxu0 0
    %698 = vmatpush1.bf16.msra.mxu0 %v507
    %699 = vmatprep.subr.bf16.mxu0 0
    %700 = vmatpush1.bf16.msra.mxu0 %v508
    %701 = vmatprep.subr.bf16.mxu0 0
    %702 = vmatpush1.bf16.msra.mxu0 0
    %703 = vmatprep.subr.bf16.mxu0 0
    %704 = vmatpush1.bf16.msra.mxu0 0
    %705 = vmatprep.subr.bf16.mxu0 0
    %706 = vmatpush1.bf16.msra.mxu0 0
    %707 = vmatprep.subr.bf16.mxu0 0
    %708 = vmatpush1.bf16.msra.mxu0 0
    %709 = vmatprep.subr.bf16.mxu0 0
    %710 = vmatpush1.bf16.msra.mxu0 0
    %711 = vmatprep.subr.bf16.mxu0 0
    %712 = vmatpush1.bf16.msra.mxu0 0
    %713 = vmatprep.subr.bf16.mxu0 0
    %714 = vmatpush1.bf16.msra.mxu0 0
    %715 = vmatprep.subr.bf16.mxu0 0
    %716 = vmatpush1.bf16.msra.mxu0 0
    %717 = vmatprep.mubr.bf16.mxu0 0
    %718 = vmatmul.mubr.bf16.gmra.mrb[0].mxu0 %v221
    %v719 = vpop.f32.mrb[0].mxu0
    %v720 = vadd.f32 %v680, %v719
    %v721 = vpop.f32.mrb[0].mxu0
    %v722 = vpop.f32.mrb[0].mxu0
    %v723 = vpop.f32.mrb[0].mxu0
    %724 = vdwg.mxu0
    %v725 = vmax.f32 %v720, 0.0
    %v726 = vpack.c.bf16 %v725, %v725
    %v727 = vld [vmem:[#allocation7] sm:$0xf]
    %v728 = vld [vmem:[#allocation7 + $0x4] sm:$0xf]
    %v729 = vld [vmem:[#allocation7 + $0x8] sm:$0xf]
    %v730 = vld [vmem:[#allocation7 + $0xc] sm:$0xf]
    %v731 = vld [vmem:[#allocation7 + $0x10] sm:$0xf]
    %v732 = vld [vmem:[#allocation7 + $0x14] sm:$0xf]
    %v733 = vld [vmem:[#allocation7 + $0x18] sm:$0xf]
    %v734 = vld [vmem:[#allocation7 + $0x1c] sm:$0xf]
    %v735 = vld [vmem:[#allocation7 + $0x20] sm:$0xf]
    %v736 = vld [vmem:[#allocation7 + $0x24] sm:$0xf]
    %v737 = vld [vmem:[#allocation7 + $0x28] sm:$0xf]
    %v738 = vld [vmem:[#allocation7 + $0x2c] sm:$0xf]
    %v739 = vld [vmem:[#allocation7 + $0x30] sm:$0xf]
    %v740 = vld [vmem:[#allocation7 + $0x34] sm:$0xf]
    %v741 = vld [vmem:[#allocation7 + $0x38] sm:$0xf]
    %v742 = vld [vmem:[#allocation7 + $0x3c] sm:$0xf]
    %v743 = vld [vmem:[%s4] sm:$0x1]
    %v745 = vlaneseq
    %v746 = vshrl.u32 %v745, 7
    %v747 = vsub.s32 0, %v746
    %v748 = vrot.slane %v743, %v747
    %v766 = vunpack.c.l.b16 %v727
    %v767 = vunpack.c.l.b16 %v728
    %v768 = vunpack.c.l.b16 %v729
    %v769 = vunpack.c.l.b16 %v730
    %v770 = vunpack.c.l.b16 %v731
    %v771 = vunpack.c.l.b16 %v732
    %v772 = vunpack.c.l.b16 %v733
    %v773 = vunpack.c.l.b16 %v734
    %v774 = vunpack.c.l.b16 %v735
    %v775 = vunpack.c.l.b16 %v736
    %v776 = vunpack.c.l.b16 %v737
    %v777 = vunpack.c.l.b16 %v738
    %v778 = vunpack.c.l.b16 %v739
    %v779 = vunpack.c.l.b16 %v740
    %v780 = vunpack.c.l.b16 %v741
    %v781 = vunpack.c.l.b16 %v742
    %v782 = vpack.c.b16 %v767, %v766
    %v783 = vpack.c.b16 %v769, %v768
    %v784 = vpack.c.b16 %v771, %v770
    %v785 = vpack.c.b16 %v773, %v772
    %v786 = vpack.c.b16 %v775, %v774
    %v787 = vpack.c.b16 %v777, %v776
    %v788 = vpack.c.b16 %v779, %v778
    %v789 = vpack.c.b16 %v781, %v780
    %798 = vmatprep.subr.bf16.mxu0 0
    %799 = vmatpush1.bf16.msra.mxu0 %v782
    %800 = vmatprep.subr.bf16.mxu0 0
    %801 = vmatpush1.bf16.msra.mxu0 %v783
    %802 = vmatprep.subr.bf16.mxu0 0
    %803 = vmatpush1.bf16.msra.mxu0 %v784
    %804 = vmatprep.subr.bf16.mxu0 0
    %805 = vmatpush1.bf16.msra.mxu0 %v785
    %806 = vmatprep.subr.bf16.mxu0 0
    %807 = vmatpush1.bf16.msra.mxu0 %v786
    %808 = vmatprep.subr.bf16.mxu0 0
    %809 = vmatpush1.bf16.msra.mxu0 %v787
    %810 = vmatprep.subr.bf16.mxu0 0
    %811 = vmatpush1.bf16.msra.mxu0 %v788
    %812 = vmatprep.subr.bf16.mxu0 0
    %813 = vmatpush1.bf16.msra.mxu0 %v789
    %814 = vmatprep.subr.bf16.mxu0 0
    %815 = vmatpush1.bf16.msra.mxu0 0
    %816 = vmatprep.subr.bf16.mxu0 0
    %817 = vmatpush1.bf16.msra.mxu0 0
    %818 = vmatprep.subr.bf16.mxu0 0
    %819 = vmatpush1.bf16.msra.mxu0 0
    %820 = vmatprep.subr.bf16.mxu0 0
    %821 = vmatpush1.bf16.msra.mxu0 0
    %822 = vmatprep.subr.bf16.mxu0 0
    %823 = vmatpush1.bf16.msra.mxu0 0
    %824 = vmatprep.subr.bf16.mxu0 0
    %825 = vmatpush1.bf16.msra.mxu0 0
    %826 = vmatprep.subr.bf16.mxu0 0
    %827 = vmatpush1.bf16.msra.mxu0 0
    %828 = vmatprep.subr.bf16.mxu0 0
    %829 = vmatpush1.bf16.msra.mxu0 0
    %830 = vmatprep.mubr.bf16.mxu0 0
    %831 = vmatmul.mubr.bf16.gmra.mrb[0].mxu0 %v726
    %v832 = vpop.f32.mrb[0].mxu0
    %v833 = vadd.f32 %v748, %v832
    %v834 = vpop.f32.mrb[0].mxu0
    %v835 = vpop.f32.mrb[0].mxu0
    %v836 = vpop.f32.mrb[0].mxu0
    %837 = vdwg.mxu0
    %v838 = vmax.f32 %v833, 0.0
    %v839 = vpack.c.bf16 %v838, %v838
    %v840 = vld [vmem:[#allocation8] sm:$0xf]
    %v841 = vld [vmem:[#allocation8 + $0x4] sm:$0xf]
    %v842 = vld [vmem:[#allocation8 + $0x8] sm:$0xf]
    %v843 = vld [vmem:[#allocation8 + $0xc] sm:$0xf]
    %v844 = vld [vmem:[#allocation8 + $0x10] sm:$0xf]
    %v845 = vld [vmem:[#allocation8 + $0x14] sm:$0xf]
    %v846 = vld [vmem:[#allocation8 + $0x18] sm:$0xf]
    %v847 = vld [vmem:[#allocation8 + $0x1c] sm:$0xf]
    %v848 = vld [vmem:[#allocation8 + $0x20] sm:$0xf]
    %v849 = vld [vmem:[#allocation8 + $0x24] sm:$0xf]
    %v850 = vld [vmem:[#allocation8 + $0x28] sm:$0xf]
    %v851 = vld [vmem:[#allocation8 + $0x2c] sm:$0xf]
    %v852 = vld [vmem:[#allocation8 + $0x30] sm:$0xf]
    %v853 = vld [vmem:[#allocation8 + $0x34] sm:$0xf]
    %v854 = vld [vmem:[#allocation8 + $0x38] sm:$0xf]
    %v855 = vld [vmem:[#allocation8 + $0x3c] sm:$0xf]
    %v856 = vld [vmem:[%s6] sm:$0x1]
    %v858 = vlaneseq
    %v859 = vshrl.u32 %v858, 7
    %v860 = vsub.s32 0, %v859
    %v861 = vrot.slane %v856, %v860
    %v879 = vunpack.c.l.b16 %v840
    %v880 = vunpack.c.l.b16 %v841
    %v881 = vunpack.c.l.b16 %v842
    %v882 = vunpack.c.l.b16 %v843
    %v883 = vunpack.c.l.b16 %v844
    %v884 = vunpack.c.l.b16 %v845
    %v885 = vunpack.c.l.b16 %v846
    %v886 = vunpack.c.l.b16 %v847
    %v887 = vunpack.c.l.b16 %v848
    %v888 = vunpack.c.l.b16 %v849
    %v889 = vunpack.c.l.b16 %v850
    %v890 = vunpack.c.l.b16 %v851
    %v891 = vunpack.c.l.b16 %v852
    %v892 = vunpack.c.l.b16 %v853
    %v893 = vunpack.c.l.b16 %v854
    %v894 = vunpack.c.l.b16 %v855
    %v895 = vpack.c.b16 %v880, %v879
    %v896 = vpack.c.b16 %v882, %v881
    %v897 = vpack.c.b16 %v884, %v883
    %v898 = vpack.c.b16 %v886, %v885
    %v899 = vpack.c.b16 %v888, %v887
    %v900 = vpack.c.b16 %v890, %v889
    %v901 = vpack.c.b16 %v892, %v891
    %v902 = vpack.c.b16 %v894, %v893
    %911 = vmatprep.subr.bf16.mxu0 0
    %912 = vmatpush1.bf16.msra.mxu0 %v895
    %913 = vmatprep.subr.bf16.mxu0 0
    %914 = vmatpush1.bf16.msra.mxu0 %v896
    %915 = vmatprep.subr.bf16.mxu0 0
    %916 = vmatpush1.bf16.msra.mxu0 %v897
    %917 = vmatprep.subr.bf16.mxu0 0
    %918 = vmatpush1.bf16.msra.mxu0 %v898
    %919 = vmatprep.subr.bf16.mxu0 0
    %920 = vmatpush1.bf16.msra.mxu0 %v899
    %921 = vmatprep.subr.bf16.mxu0 0
    %922 = vmatpush1.bf16.msra.mxu0 %v900
    %923 = vmatprep.subr.bf16.mxu0 0
    %924 = vmatpush1.bf16.msra.mxu0 %v901
    %925 = vmatprep.subr.bf16.mxu0 0
    %926 = vmatpush1.bf16.msra.mxu0 %v902
    %927 = vmatprep.subr.bf16.mxu0 0
    %928 = vmatpush1.bf16.msra.mxu0 0
    %929 = vmatprep.subr.bf16.mxu0 0
    %930 = vmatpush1.bf16.msra.mxu0 0
    %931 = vmatprep.subr.bf16.mxu0 0
    %932 = vmatpush1.bf16.msra.mxu0 0
    %933 = vmatprep.subr.bf16.mxu0 0
    %934 = vmatpush1.bf16.msra.mxu0 0
    %935 = vmatprep.subr.bf16.mxu0 0
    %936 = vmatpush1.bf16.msra.mxu0 0
    %937 = vmatprep.subr.bf16.mxu0 0
    %938 = vmatpush1.bf16.msra.mxu0 0
    %939 = vmatprep.subr.bf16.mxu0 0
    %940 = vmatpush1.bf16.msra.mxu0 0
    %941 = vmatprep.subr.bf16.mxu0 0
    %942 = vmatpush1.bf16.msra.mxu0 0
    %943 = vmatprep.mubr.bf16.mxu0 0
    %944 = vmatmul.mubr.bf16.gmra.mrb[0].mxu0 %v839
    %v945 = vpop.f32.mrb[0].mxu0
    %v946 = vadd.f32 %v861, %v945
    %v947 = vpop.f32.mrb[0].mxu0
    %v948 = vpop.f32.mrb[0].mxu0
    %v949 = vpop.f32.mrb[0].mxu0
    %950 = vdwg.mxu0
    %951 = vst [vmem:[#allocation10] sm:$0xff] %v946
    // Predicated region
    $region46: #{tpu_custom_call.1} parent=1 // pred_check
      _
    $region47: #{tpu_custom_call.1} parent=1 // pred_check_branch
      %953 = sbr.rel (0) target = $region49
    $region48: #{tpu_custom_call.1} parent=1 // pred_region
      %s955 = ssub.s32 128, 128
      %956 = vsyncadd [#allocation4], %s955
      %s958 = sshll.u32 [#allocation10], 4
      %s959 = int_to_ptr.vmem [resolvable:$true] %s958
      %961 = dma.vmem_to_hbm [thread:$0]  %s959, 128, %s7, [#allocation4]
    $region49: #{tpu_custom_call.1} parent=1 // pred_fallthru
      _
    // Predicated region
    $region50: #{tpu_custom_call.1} parent=1 // pred_check
      _
    $region51: #{tpu_custom_call.1} parent=1 // pred_check_branch
      %963 = sbr.rel (0) target = $region53
    $region52: #{tpu_custom_call.1} parent=1 // pred_region
      %964 = dma.done [#allocation4], 128
    $region53: #{tpu_custom_call.1} parent=1 // pred_fallthru
      _
    %965 = vsyncpa [#allocation3], 1
    %966 = vsyncpa [#allocation6], 1
    %967 = vsyncpa [#allocation9], 1
    %968 = vsyncpa [#allocation4], 1

</llo_original>
